<compile_context>
chip_gen: v6e
topology: v6e:2x2x1
jax: 0.10.0
libtpu: 0.0.40
codegen_flags: <defaults>
</compile_context>

<pallas_src>
import jax
import jax.numpy as jnp
from jax.experimental import pallas as pl
from jax.experimental.pallas import tpu as pltpu


def _cdiv(a, b):
    return -(-a // b)


def _round_up(n, m):
    return _cdiv(n, m) * m


def _mlp_fused_kernel(x_ref, w1_ref, b1_ref, w2_ref, b2_ref, wf_ref, bf_ref,
                      out_ref):
    cdt = w1_ref.dtype                                         # compute dtype
    xT = x_ref[...]                                            # (10, TB)

    # layer 1 of all three branches fused: W1T (60,10) @ xT -> (60, TB)
    h = jnp.dot(w1_ref[...], xT, preferred_element_type=jnp.float32)
    h = jnp.maximum(h + b1_ref[...], 0.0)                      # bias (60,1) f32

    # layer 2 of all three branches as block-diagonal W2T (90,60) -> (90, TB)
    e = jnp.dot(w2_ref[...], h.astype(cdt),
                preferred_element_type=jnp.float32)
    e = jnp.maximum(e + b2_ref[...], 0.0)                      # bias (90,1) f32

    # feed-forward head WfT (4,90) -> (4, TB); concat is implicit in the 90 dim
    o = jnp.dot(wf_ref[...], e.astype(cdt),
                preferred_element_type=jnp.float32)
    out_ref[...] = jnp.maximum(o + bf_ref[...], 0.0)           # (4, TB) f32


def my_model_forward(x, fused, *, max_tile=1024, compute_dtype=jnp.float32):
    """Forward pass of MyModel via a single fused, feature-major Pallas kernel."""
    B, F = x.shape
    assert F == 10, "MyModel expects 10 input features"
    LANE = 128

    # Near-equal tiles (padding < 128 rows per tile) instead of padding B up to
    # a multiple of max_tile.
    n_tiles = max(1, _cdiv(B, max_tile))
    # Even grid so v7x's two TensorCores stay balanced (no-op on v5e/v6e).
    if n_tiles > 1 and n_tiles % 2:
        n_tiles += 1
    TB = _round_up(_cdiv(B, n_tiles), LANE)   # lane axis -> multiple of 128
    Bp = n_tiles * TB

    # Layout plumbing in the wrapper: pad + transpose x to feature-major.
    x_t = jnp.pad(x, ((0, Bp - B), (0, 0))) if Bp != B else x
    x_t = x_t.T.astype(compute_dtype)                          # (10, Bp)

    w1 = fused["w1t"].astype(compute_dtype)
    w2 = fused["w2t"].astype(compute_dtype)
    wf = fused["wft"].astype(compute_dtype)

    const = lambda i: (0, 0)   # weights/biases resident across the grid
    out_t = pl.pallas_call(
        _mlp_fused_kernel,
        out_shape=jax.ShapeDtypeStruct((4, Bp), jnp.float32),
        grid=(n_tiles,),
        in_specs=[
            pl.BlockSpec((10, TB), lambda i: (0, i)),   # xT tile (batch on lanes)
            pl.BlockSpec((60, 10), const),              # W1ᵀ (concat of 3)
            pl.BlockSpec((60, 1), const),               # b1ᵀ (f32)
            pl.BlockSpec((90, 60), const),              # W2ᵀ (block-diagonal)
            pl.BlockSpec((90, 1), const),               # b2ᵀ (f32)
            pl.BlockSpec((4, 90), const),               # Wfᵀ
            pl.BlockSpec((4, 1), const),                # bfᵀ (f32)
        ],
        out_specs=pl.BlockSpec((4, TB), lambda i: (0, i)),
        compiler_params=pltpu.CompilerParams(
            dimension_semantics=("parallel",)),
    )(x_t, w1, fused["b1t"], w2, fused["b2t"], wf, fused["bft"])

    out = out_t.T                                              # (Bp, 4)
    return out[:B] if Bp != B else out


my_model_forward_jit = jax.jit(
    my_model_forward, static_argnames=("max_tile", "compute_dtype"))


def init_params():
    """Deterministic init mimicking PyTorch's default U(-1/sqrt(fan_in), +)."""
    key = jax.random.PRNGKey(0)

    def linear(key, fan_in, fan_out):
        kw, kb = jax.random.split(key)
        bound = 1.0 / jnp.sqrt(fan_in)
        w = jax.random.uniform(kw, (fan_in, fan_out), jnp.float32, -bound, bound)
        b = jax.random.uniform(kb, (1, fan_out), jnp.float32, -bound, bound)
        return w, b

    keys = jax.random.split(key, 7)
    w1s, b1s = linear(keys[0], 10, 20)
    w2s, b2s = linear(keys[1], 20, 30)
    w1n, b1n = linear(keys[2], 10, 20)
    w2n, b2n = linear(keys[3], 20, 30)
    w1o, b1o = linear(keys[4], 10, 20)
    w2o, b2o = linear(keys[5], 20, 30)
    wf, bf = linear(keys[6], 90, 4)
    return dict(
        w1s=w1s, b1s=b1s, w2s=w2s, b2s=b2s,
        w1n=w1n, b1n=b1n, w2n=w2n, b2n=b2n,
        w1o=w1o, b1o=b1o, w2o=w2o, b2o=b2o,
        wf=wf, bf=bf,
    )


def fuse_params(p):
    """Host-side one-time weight fusion + transposition for the kernel.

    Layer 1: concat along out-features -> (10,60), transposed to (60,10).
    Layer 2: block-diagonal (60,90) so h_all @ W2 == concat of the per-branch
             layer-2 outputs (exact in f32), transposed to (90,60).
    Head:    (90,4) transposed to (4,90).  Biases become column vectors.
    """
    w1 = jnp.concatenate([p["w1s"], p["w1n"], p["w1o"]], axis=1)   # (10, 60)
    b1 = jnp.concatenate([p["b1s"], p["b1n"], p["b1o"]], axis=1)   # (1, 60)

    w2 = jnp.zeros((60, 90), jnp.float32)
    w2 = w2.at[0:20, 0:30].set(p["w2s"])
    w2 = w2.at[20:40, 30:60].set(p["w2n"])
    w2 = w2.at[40:60, 60:90].set(p["w2o"])
    b2 = jnp.concatenate([p["b2s"], p["b2n"], p["b2o"]], axis=1)   # (1, 90)

    return dict(
        w1t=w1.T,          # (60, 10)
        b1t=b1.T,          # (60, 1)
        w2t=w2.T,          # (90, 60)
        b2t=b2.T,          # (90, 1)
        wft=p["wf"].T,     # (4, 90)
        bft=p["bf"].T,     # (4, 1)
    )


def reference_forward(x, p):
    """Pure-JAX f32 reference matching the PyTorch module semantics."""
    def branch(x, w1, b1, w2, b2):
        h = jnp.maximum(x @ w1 + b1, 0.0)
        return jnp.maximum(h @ w2 + b2, 0.0)

    e_self = branch(x, p["w1s"], p["b1s"], p["w2s"], p["b2s"])
    e_neib = branch(x, p["w1n"], p["b1n"], p["w2n"], p["b2n"])
    e_obst = branch(x, p["w1o"], p["b1o"], p["w2o"], p["b2o"])
    embeds = jnp.concatenate([e_self, e_neib, e_obst], axis=1)  # (B, 90)
    return jnp.maximum(embeds @ p["wf"] + p["bf"], 0.0)


if __name__ == "__main__":
    params = init_params()
    fused = fuse_params(params)

    # Small shape consistent with the module: batch=8, features=10.
    key = jax.random.PRNGKey(0)
    x_small = jax.random.normal(key, (8, 10), dtype=jnp.float32)

    out_small = jax.block_until_ready(my_model_forward_jit(x_small, fused))
    ref_small = reference_forward(x_small, params)
    assert out_small.shape == (8, 4)
    assert jnp.allclose(out_small, ref_small, atol=1e-5, rtol=1e-5), \
        "mismatch vs reference (small batch, f32)"

    # Ragged batch: exercises adaptive near-equal tiles, the even (4-step)
    # parallel grid, and lane-padding of the trailing tile.
    x_rag = jax.random.normal(jax.random.PRNGKey(1), (517, 10),
                              dtype=jnp.float32)
    out_rag = jax.block_until_ready(
        my_model_forward_jit(x_rag, fused, max_tile=256))
    ref_rag = reference_forward(x_rag, params)
    assert out_rag.shape == (517, 4)
    assert jnp.allclose(out_rag, ref_rag, atol=1e-5, rtol=1e-5), \
        "mismatch vs reference (ragged batch, f32)"

    # Fast path: bf16 operands + f32 MXU accumulation (relaxed tolerance).
    out_bf16 = jax.block_until_ready(
        my_model_forward_jit(x_rag, fused, max_tile=256,
                             compute_dtype=jnp.bfloat16))
    assert out_bf16.shape == (517, 4)
    assert jnp.allclose(out_bf16, ref_rag, atol=1e-1, rtol=1e-1), \
        "mismatch vs reference (ragged batch, bf16 operands)"

    print("KERNEL_OK")
</pallas_src>

<mosaic_0001>
module attributes {stable_mosaic.version = 11 : i64} {
  func.func @_mlp_fused_kernel(%arg0: i32, %arg1: memref<10x128xf32, #tpu.memory_space<vmem>>, %arg2: memref<60x10xf32, #tpu.memory_space<vmem>>, %arg3: memref<60x1xf32, #tpu.memory_space<vmem>>, %arg4: memref<90x60xf32, #tpu.memory_space<vmem>>, %arg5: memref<90x1xf32, #tpu.memory_space<vmem>>, %arg6: memref<4x90xf32, #tpu.memory_space<vmem>>, %arg7: memref<4x1xf32, #tpu.memory_space<vmem>>, %arg8: memref<4x128xf32, #tpu.memory_space<vmem>>) attributes {dimension_semantics = [#tpu.dimension_semantics<parallel>], iteration_bounds = array<i64: 1>, scalar_prefetch = 0 : i64, scratch_operands = 0 : i64, tpu.core_type = #tpu.core_type<tc>, window_params = [{transform_indices = @transform_0, window_bounds = array<i64: 10, 128>}, {pipeline_mode = #tpu.pipeline_mode<synchronous>, transform_indices = @transform_1, window_bounds = array<i64: 60, 10>}, {pipeline_mode = #tpu.pipeline_mode<synchronous>, transform_indices = @transform_2, window_bounds = array<i64: 60, 1>}, {pipeline_mode = #tpu.pipeline_mode<synchronous>, transform_indices = @transform_3, window_bounds = array<i64: 90, 60>}, {pipeline_mode = #tpu.pipeline_mode<synchronous>, transform_indices = @transform_4, window_bounds = array<i64: 90, 1>}, {pipeline_mode = #tpu.pipeline_mode<synchronous>, transform_indices = @transform_5, window_bounds = array<i64: 4, 90>}, {pipeline_mode = #tpu.pipeline_mode<synchronous>, transform_indices = @transform_6, window_bounds = array<i64: 4, 1>}, {transform_indices = @transform_7, window_bounds = array<i64: 4, 128>}]} {
    %c0 = arith.constant 0 : index
    %c0_0 = arith.constant 0 : index
    %0 = vector.load %arg1[%c0, %c0_0] : memref<10x128xf32, #tpu.memory_space<vmem>>, vector<10x128xf32>
    %c0_1 = arith.constant 0 : index
    %c0_2 = arith.constant 0 : index
    %1 = vector.load %arg2[%c0_1, %c0_2] : memref<60x10xf32, #tpu.memory_space<vmem>>, vector<60x10xf32>
    %cst = arith.constant dense<0.000000e+00> : vector<60x128xf32>
    %2 = tpu.matmul %1, %0, %cst {dimension_numbers = #tpu.dot_dimension_numbers<[1], [0], [0], [1], [0, 0, 1, 1], [], []>} : vector<60x10xf32>, vector<10x128xf32>, vector<60x128xf32> -> vector<60x128xf32>
    %c0_3 = arith.constant 0 : index
    %c0_4 = arith.constant 0 : index
    %3 = vector.load %arg3[%c0_3, %c0_4] : memref<60x1xf32, #tpu.memory_space<vmem>>, vector<60x1xf32>
    %4 = vector.broadcast %3 : vector<60x1xf32> to vector<60x128xf32>
    %5 = arith.addf %2, %4 : vector<60x128xf32>
    %cst_5 = arith.constant 0.000000e+00 : f32
    %6 = vector.broadcast %cst_5 : f32 to vector<60x128xf32>
    %7 = arith.maximumf %5, %6 : vector<60x128xf32>
    %c0_6 = arith.constant 0 : index
    %c0_7 = arith.constant 0 : index
    %8 = vector.load %arg4[%c0_6, %c0_7] : memref<90x60xf32, #tpu.memory_space<vmem>>, vector<90x60xf32>
    %cst_8 = arith.constant dense<0.000000e+00> : vector<90x128xf32>
    %9 = tpu.matmul %8, %7, %cst_8 {dimension_numbers = #tpu.dot_dimension_numbers<[1], [0], [0], [1], [0, 0, 1, 1], [], []>} : vector<90x60xf32>, vector<60x128xf32>, vector<90x128xf32> -> vector<90x128xf32>
    %c0_9 = arith.constant 0 : index
    %c0_10 = arith.constant 0 : index
    %10 = vector.load %arg5[%c0_9, %c0_10] : memref<90x1xf32, #tpu.memory_space<vmem>>, vector<90x1xf32>
    %11 = vector.broadcast %10 : vector<90x1xf32> to vector<90x128xf32>
    %12 = arith.addf %9, %11 : vector<90x128xf32>
    %cst_11 = arith.constant 0.000000e+00 : f32
    %13 = vector.broadcast %cst_11 : f32 to vector<90x128xf32>
    %14 = arith.maximumf %12, %13 : vector<90x128xf32>
    %c0_12 = arith.constant 0 : index
    %c0_13 = arith.constant 0 : index
    %15 = vector.load %arg6[%c0_12, %c0_13] : memref<4x90xf32, #tpu.memory_space<vmem>>, vector<4x90xf32>
    %cst_14 = arith.constant dense<0.000000e+00> : vector<4x128xf32>
    %16 = tpu.matmul %15, %14, %cst_14 {dimension_numbers = #tpu.dot_dimension_numbers<[1], [0], [0], [1], [0, 0, 1, 1], [], []>} : vector<4x90xf32>, vector<90x128xf32>, vector<4x128xf32> -> vector<4x128xf32>
    %c0_15 = arith.constant 0 : index
    %c0_16 = arith.constant 0 : index
    %17 = vector.load %arg7[%c0_15, %c0_16] : memref<4x1xf32, #tpu.memory_space<vmem>>, vector<4x1xf32>
    %18 = vector.broadcast %17 : vector<4x1xf32> to vector<4x128xf32>
    %19 = arith.addf %16, %18 : vector<4x128xf32>
    %cst_17 = arith.constant 0.000000e+00 : f32
    %20 = vector.broadcast %cst_17 : f32 to vector<4x128xf32>
    %21 = arith.maximumf %19, %20 : vector<4x128xf32>
    %c0_18 = arith.constant 0 : index
    %c0_19 = arith.constant 0 : index
    %22 = vector.load %arg8[%c0_18, %c0_19] : memref<4x128xf32, #tpu.memory_space<vmem>>, vector<4x128xf32>
    tpu.vector_store %arg8[%c0_18, %c0_19], %21 {strides = array<i32>} : memref<4x128xf32, #tpu.memory_space<vmem>>, vector<4x128xf32>,
    return
  }
  func.func @transform_0(%arg0: i32) -> (i32, i32) {
    %c0_i32 = arith.constant 0 : i32
    %c0_i32_0 = arith.constant 0 : i32
    return %c0_i32, %arg0 : i32, i32
  }
  func.func @transform_1(%arg0: i32) -> (i32, i32) {
    %c0_i32 = arith.constant 0 : i32
    %c0_i32_0 = arith.constant 0 : i32
    %c0_i32_1 = arith.constant 0 : i32
    return %c0_i32, %c0_i32_0 : i32, i32
  }
  func.func @transform_2(%arg0: i32) -> (i32, i32) {
    %c0_i32 = arith.constant 0 : i32
    %c0_i32_0 = arith.constant 0 : i32
    %c0_i32_1 = arith.constant 0 : i32
    return %c0_i32, %c0_i32_0 : i32, i32
  }
  func.func @transform_3(%arg0: i32) -> (i32, i32) {
    %c0_i32 = arith.constant 0 : i32
    %c0_i32_0 = arith.constant 0 : i32
    %c0_i32_1 = arith.constant 0 : i32
    return %c0_i32, %c0_i32_0 : i32, i32
  }
  func.func @transform_4(%arg0: i32) -> (i32, i32) {
    %c0_i32 = arith.constant 0 : i32
    %c0_i32_0 = arith.constant 0 : i32
    %c0_i32_1 = arith.constant 0 : i32
    return %c0_i32, %c0_i32_0 : i32, i32
  }
  func.func @transform_5(%arg0: i32) -> (i32, i32) {
    %c0_i32 = arith.constant 0 : i32
    %c0_i32_0 = arith.constant 0 : i32
    %c0_i32_1 = arith.constant 0 : i32
    return %c0_i32, %c0_i32_0 : i32, i32
  }
  func.func @transform_6(%arg0: i32) -> (i32, i32) {
    %c0_i32 = arith.constant 0 : i32
    %c0_i32_0 = arith.constant 0 : i32
    %c0_i32_1 = arith.constant 0 : i32
    return %c0_i32, %c0_i32_0 : i32, i32
  }
  func.func @transform_7(%arg0: i32) -> (i32, i32) {
    %c0_i32 = arith.constant 0 : i32
    %c0_i32_0 = arith.constant 0 : i32
    return %c0_i32, %arg0 : i32, i32
  }
}

</mosaic_0001>

<llo_original>
// kernel: my_model_forward.1
$region0: #{my_model_forward.1}
  #allocation0 [shape = 'u32[]', space=smem, size = 0x4, offset = 0x4, fixed_abs, tag = 'smem constant byte address 0x4 - core index']
  #allocation1 [shape = 'u32[144,128]{1,0:T(1,128)}', space=vmem, size = 0x12000, scoped, tag = 'internal scratch']
  %s0 = inlined_call_operand.vmem [shape: f32[10,128], index: 0, kind: input, shape index: {}]
  %s1 = inlined_call_operand.vmem [shape: f32[60,10], index: 1, kind: input, shape index: {}]
  %s2 = inlined_call_operand.vmem [shape: f32[60,1], index: 2, kind: input, shape index: {}]
  %s3 = inlined_call_operand.vmem [shape: f32[90,60], index: 3, kind: input, shape index: {}]
  %s4 = inlined_call_operand.vmem [shape: f32[90,1], index: 4, kind: input, shape index: {}]
  %s5 = inlined_call_operand.vmem [shape: f32[4,90], index: 5, kind: input, shape index: {}]
  %s6 = inlined_call_operand.vmem [shape: f32[4,1], index: 6, kind: input, shape index: {}]
  %s7 = inlined_call_operand.hbm [shape: f32[4,128], index: 7, kind: output, shape index: {}]
  %s8 = sld [smem:[#allocation0]]
  $region38: #{my_model_forward.1} parent=0
    _
  %s10 = ssub.s32 1, %s8
  %s11 = scalar_select 0, %s10, %s8
  $region1: #{my_model_forward.1} parent=0
    #allocation2 [shape = 'u8[2048]{0}', space=vmem, size = 0x800, scoped, tag = 'output window, operand 0, single buffered']
    #allocation3 [shape = 's32[1]{0}', space=sflag, size = 0x4, scoped, tag = 'scoped memory for my_model_forward.1']
    %12 = vsyncpa [#allocation3], 0
    // Predicated region
    $region2: #{my_model_forward.1} parent=1 // pred_check
      _
    $region3: #{my_model_forward.1} parent=1 // pred_check_branch
      %14 = sbr.rel (0) target = $region5
    $region4: #{my_model_forward.1} parent=1 // pred_region
      _
    $region5: #{my_model_forward.1} parent=1 // pred_fallthru
      _
    // Predicated region
    $region6: #{my_model_forward.1} parent=1 // pred_check
      _
    $region7: #{my_model_forward.1} parent=1 // pred_check_branch
      %16 = sbr.rel (0) target = $region9
    $region8: #{my_model_forward.1} parent=1 // pred_region
      _
    $region9: #{my_model_forward.1} parent=1 // pred_fallthru
      _
    // Predicated region
    $region10: #{my_model_forward.1} parent=1 // pred_check
      _
    $region11: #{my_model_forward.1} parent=1 // pred_check_branch
      %18 = sbr.rel (0) target = $region13
    $region12: #{my_model_forward.1} parent=1 // pred_region
      _
    $region13: #{my_model_forward.1} parent=1 // pred_fallthru
      _
    // Predicated region
    $region14: #{my_model_forward.1} parent=1 // pred_check
      _
    $region15: #{my_model_forward.1} parent=1 // pred_check_branch
      %20 = sbr.rel (0) target = $region17
    $region16: #{my_model_forward.1} parent=1 // pred_region
      _
    $region17: #{my_model_forward.1} parent=1 // pred_fallthru
      _
    // Predicated region
    $region18: #{my_model_forward.1} parent=1 // pred_check
      _
    $region19: #{my_model_forward.1} parent=1 // pred_check_branch
      %22 = sbr.rel (0) target = $region21
    $region20: #{my_model_forward.1} parent=1 // pred_region
      _
    $region21: #{my_model_forward.1} parent=1 // pred_fallthru
      _
    // Predicated region
    $region22: #{my_model_forward.1} parent=1 // pred_check
      _
    $region23: #{my_model_forward.1} parent=1 // pred_check_branch
      %24 = sbr.rel (0) target = $region25
    $region24: #{my_model_forward.1} parent=1 // pred_region
      _
    $region25: #{my_model_forward.1} parent=1 // pred_fallthru
      _
    // Predicated region
    $region26: #{my_model_forward.1} parent=1 // pred_check
      _
    $region27: #{my_model_forward.1} parent=1 // pred_check_branch
      %26 = sbr.rel (0) target = $region29
    $region28: #{my_model_forward.1} parent=1 // pred_region
      _
    $region29: #{my_model_forward.1} parent=1 // pred_fallthru
      _
    %v27 = vld [vmem:[%s0] sm:$0xff]
    %v28 = vld [vmem:[%s0 + $0x8] sm:$0x3]
    %v29 = vld [vmem:[%s1] sm:$0xff]
    %v30 = vld [vmem:[%s1 + $0x8] sm:$0xff]
    %v31 = vld [vmem:[%s1 + $0x10] sm:$0xff]
    %v32 = vld [vmem:[%s1 + $0x18] sm:$0xff]
    %v33 = vld [vmem:[%s1 + $0x20] sm:$0xff]
    %v34 = vld [vmem:[%s1 + $0x28] sm:$0xff]
    %v35 = vld [vmem:[%s1 + $0x30] sm:$0xff]
    %v36 = vld [vmem:[%s1 + $0x38] sm:$0xf]
    %v37 = vld [vmem:[%s2] sm:$0xff]
    %v38 = vld [vmem:[%s2 + $0x8] sm:$0xff]
    %v39 = vld [vmem:[%s2 + $0x10] sm:$0xff]
    %v40 = vld [vmem:[%s2 + $0x18] sm:$0xff]
    %v41 = vld [vmem:[%s2 + $0x20] sm:$0xff]
    %v42 = vld [vmem:[%s2 + $0x28] sm:$0xff]
    %v43 = vld [vmem:[%s2 + $0x30] sm:$0xff]
    %v44 = vld [vmem:[%s2 + $0x38] sm:$0xf]
    %46 = vset.pattern.permute.xlu0 0
    %47 = vperm.xlu0 %46, %v37
    %v48 = vpop.permute.xlu0 %47
    %51 = vset.pattern.permute.xlu0 0
    %52 = vperm.xlu0 %51, %v38
    %v53 = vpop.permute.xlu0 %52
    %56 = vset.pattern.permute.xlu0 0
    %57 = vperm.xlu0 %56, %v39
    %v58 = vpop.permute.xlu0 %57
    %61 = vset.pattern.permute.xlu0 0
    %62 = vperm.xlu0 %61, %v40
    %v63 = vpop.permute.xlu0 %62
    %66 = vset.pattern.permute.xlu0 0
    %67 = vperm.xlu0 %66, %v41
    %v68 = vpop.permute.xlu0 %67
    %71 = vset.pattern.permute.xlu0 0
    %72 = vperm.xlu0 %71, %v42
    %v73 = vpop.permute.xlu0 %72
    %76 = vset.pattern.permute.xlu0 0
    %77 = vperm.xlu0 %76, %v43
    %v78 = vpop.permute.xlu0 %77
    %81 = vset.pattern.permute.xlu0 0
    %82 = vperm.xlu0 %81, %v44
    %v83 = vpop.permute.xlu0 %82
    %vm85 = vcmask 80896
    %v87 = vsel %vm85, %v29, 0
    %v90 = vsel %vm85, %v30, 0
    %v93 = vsel %vm85, %v31, 0
    %v96 = vsel %vm85, %v32, 0
    %v99 = vsel %vm85, %v33, 0
    %v102 = vsel %vm85, %v34, 0
    %v105 = vsel %vm85, %v35, 0
    %v108 = vsel %vm85, %v36, 0
    %vm110 = vcmask 1041408
    %v112 = vsel %vm110, %v28, 0
    %114 = vmatprep.subr.mxu0 0.0
    %115 = vmatpush1.msra.mxu0 0.0
    %116 = vmatprep.subr.mxu0 0.0
    %117 = vmatpush1.msra.mxu0 0.0
    %118 = vmatprep.subr.mxu0 0.0
    %119 = vmatpush1.msra.mxu0 0.0
    %120 = vmatprep.subr.mxu0 0.0
    %121 = vmatpush1.msra.mxu0 0.0
    %122 = vmatprep.subr.mxu0 0.0
    %123 = vmatpush1.msra.mxu0 0.0
    %124 = vmatprep.subr.mxu0 0.0
    %125 = vmatpush1.msra.mxu0 0.0
    %126 = vmatprep.subr.mxu0 0.0
    %127 = vmatpush1.msra.mxu0 0.0
    %128 = vmatprep.subr.mxu0 0.0
    %129 = vmatpush1.msra.mxu0 0.0
    %130 = vmatprep.subr.mxu0 0.0
    %131 = vmatpush1.msra.mxu0 0.0
    %132 = vmatprep.subr.mxu0 0.0
    %133 = vmatpush1.msra.mxu0 0.0
    %134 = vmatprep.subr.mxu0 0.0
    %135 = vmatpush1.msra.mxu0 0.0
    %136 = vmatprep.subr.mxu0 0.0
    %137 = vmatpush1.msra.mxu0 0.0
    %138 = vmatprep.subr.mxu0 0.0
    %139 = vmatpush1.msra.mxu0 0.0
    %140 = vmatprep.subr.mxu0 0.0
    %141 = vmatpush1.msra.mxu0 0.0
    %142 = vmatprep.subr.mxu0 0.0
    %143 = vmatpush1.msra.mxu0 %v112
    %144 = vmatprep.subr.mxu0 0.0
    %145 = vmatpush1.msra.mxu0 %v27
    %146 = vmatprep.subr.mxu0 0.0
    %147 = vmatpush2.msra.mxu0 0.0
    %148 = vmatprep.subr.mxu0 0.0
    %149 = vmatpush2.msra.mxu0 0.0
    %150 = vmatprep.subr.mxu0 0.0
    %151 = vmatpush2.msra.mxu0 0.0
    %152 = vmatprep.subr.mxu0 0.0
    %153 = vmatpush2.msra.mxu0 0.0
    %154 = vmatprep.subr.mxu0 0.0
    %155 = vmatpush2.msra.mxu0 0.0
    %156 = vmatprep.subr.mxu0 0.0
    %157 = vmatpush2.msra.mxu0 0.0
    %158 = vmatprep.subr.mxu0 0.0
    %159 = vmatpush2.msra.mxu0 0.0
    %160 = vmatprep.subr.mxu0 0.0
    %161 = vmatpush2.msra.mxu0 0.0
    %162 = vmatprep.subr.mxu0 0.0
    %163 = vmatpush2.msra.mxu0 0.0
    %164 = vmatprep.subr.mxu0 0.0
    %165 = vmatpush2.msra.mxu0 0.0
    %166 = vmatprep.subr.mxu0 0.0
    %167 = vmatpush2.msra.mxu0 0.0
    %168 = vmatprep.subr.mxu0 0.0
    %169 = vmatpush2.msra.mxu0 0.0
    %170 = vmatprep.subr.mxu0 0.0
    %171 = vmatpush2.msra.mxu0 0.0
    %172 = vmatprep.subr.mxu0 0.0
    %173 = vmatpush2.msra.mxu0 0.0
    %174 = vmatprep.subr.mxu0 0.0
    %175 = vmatpush2.msra.mxu0 0.0
    %176 = vmatprep.subr.mxu0 0.0
    %177 = vmatpush2.msra.mxu0 0.0
    %178 = vmatprep.mubr.f32.mxu0 0.0
    %179 = vmatmul.mubr.f32.gmra.mxu0 %v87
    %v180 = vpop.f32.mrf.mxu0
    %v181 = vadd.f32 %v48, %v180
    %v182 = vpop.f32.mrf.mxu0
    %183 = vmatprep.mubr.f32.mxu0 0.0
    %184 = vmatmul.mubr.f32.gmra.mxu0 %v90
    %v185 = vpop.f32.mrf.mxu0
    %v186 = vadd.f32 %v53, %v185
    %v187 = vpop.f32.mrf.mxu0
    %188 = vmatprep.mubr.f32.mxu0 0.0
    %189 = vmatmul.mubr.f32.gmra.mxu0 %v93
    %v190 = vpop.f32.mrf.mxu0
    %v191 = vadd.f32 %v58, %v190
    %v192 = vpop.f32.mrf.mxu0
    %193 = vmatprep.mubr.f32.mxu0 0.0
    %194 = vmatmul.mubr.f32.gmra.mxu0 %v96
    %v195 = vpop.f32.mrf.mxu0
    %v196 = vadd.f32 %v63, %v195
    %v197 = vpop.f32.mrf.mxu0
    %198 = vmatprep.mubr.f32.mxu0 0.0
    %199 = vmatmul.mubr.f32.gmra.mxu0 %v99
    %v200 = vpop.f32.mrf.mxu0
    %v201 = vadd.f32 %v68, %v200
    %v202 = vpop.f32.mrf.mxu0
    %203 = vmatprep.mubr.f32.mxu0 0.0
    %204 = vmatmul.mubr.f32.gmra.mxu0 %v102
    %v205 = vpop.f32.mrf.mxu0
    %v206 = vadd.f32 %v73, %v205
    %v207 = vpop.f32.mrf.mxu0
    %208 = vmatprep.mubr.f32.mxu0 0.0
    %209 = vmatmul.mubr.f32.gmra.mxu0 %v105
    %v210 = vpop.f32.mrf.mxu0
    %v211 = vadd.f32 %v78, %v210
    %v212 = vpop.f32.mrf.mxu0
    %213 = vmatprep.mubr.f32.mxu0 0.0
    %214 = vmatmul.mubr.f32.gmra.mxu0 %v108
    %v215 = vpop.f32.mrf.mxu0
    %v216 = vadd.f32 %v83, %v215
    %v217 = vpop.f32.mrf.mxu0
    %218 = vdwg.mxu0
    %v219 = vmax.f32 %v181, 0.0
    %v220 = vmax.f32 %v186, 0.0
    %v221 = vmax.f32 %v191, 0.0
    %v222 = vmax.f32 %v196, 0.0
    %v223 = vmax.f32 %v201, 0.0
    %v224 = vmax.f32 %v206, 0.0
    %v225 = vmax.f32 %v211, 0.0
    %v226 = vmax.f32 %v216, 0.0
    %v227 = vld [vmem:[%s3] sm:$0xff]
    %v228 = vld [vmem:[%s3 + $0x8] sm:$0xff]
    %v229 = vld [vmem:[%s3 + $0x10] sm:$0xff]
    %v230 = vld [vmem:[%s3 + $0x18] sm:$0xff]
    %v231 = vld [vmem:[%s3 + $0x20] sm:$0xff]
    %v232 = vld [vmem:[%s3 + $0x28] sm:$0xff]
    %v233 = vld [vmem:[%s3 + $0x30] sm:$0xff]
    %v234 = vld [vmem:[%s3 + $0x38] sm:$0xff]
    %v235 = vld [vmem:[%s3 + $0x40] sm:$0xff]
    %v236 = vld [vmem:[%s3 + $0x48] sm:$0xff]
    %v237 = vld [vmem:[%s3 + $0x50] sm:$0xff]
    %v238 = vld [vmem:[%s3 + $0x58] sm:$0x3]
    %v239 = vld [vmem:[%s4] sm:$0xff]
    %v240 = vld [vmem:[%s4 + $0x8] sm:$0xff]
    %v241 = vld [vmem:[%s4 + $0x10] sm:$0xff]
    %v242 = vld [vmem:[%s4 + $0x18] sm:$0xff]
    %v243 = vld [vmem:[%s4 + $0x20] sm:$0xff]
    %v244 = vld [vmem:[%s4 + $0x28] sm:$0xff]
    %v245 = vld [vmem:[%s4 + $0x30] sm:$0xff]
    %v246 = vld [vmem:[%s4 + $0x38] sm:$0xff]
    %v247 = vld [vmem:[%s4 + $0x40] sm:$0xff]
    %v248 = vld [vmem:[%s4 + $0x48] sm:$0xff]
    %v249 = vld [vmem:[%s4 + $0x50] sm:$0xff]
    %v250 = vld [vmem:[%s4 + $0x58] sm:$0x3]
    %252 = vset.pattern.permute.xlu0 0
    %253 = vperm.xlu0 %252, %v239
    %v254 = vpop.permute.xlu0 %253
    %257 = vset.pattern.permute.xlu0 0
    %258 = vperm.xlu0 %257, %v240
    %v259 = vpop.permute.xlu0 %258
    %262 = vset.pattern.permute.xlu0 0
    %263 = vperm.xlu0 %262, %v241
    %v264 = vpop.permute.xlu0 %263
    %267 = vset.pattern.permute.xlu0 0
    %268 = vperm.xlu0 %267, %v242
    %v269 = vpop.permute.xlu0 %268
    %272 = vset.pattern.permute.xlu0 0
    %273 = vperm.xlu0 %272, %v243
    %v274 = vpop.permute.xlu0 %273
    %277 = vset.pattern.permute.xlu0 0
    %278 = vperm.xlu0 %277, %v244
    %v279 = vpop.permute.xlu0 %278
    %282 = vset.pattern.permute.xlu0 0
    %283 = vperm.xlu0 %282, %v245
    %v284 = vpop.permute.xlu0 %283
    %287 = vset.pattern.permute.xlu0 0
    %288 = vperm.xlu0 %287, %v246
    %v289 = vpop.permute.xlu0 %288
    %292 = vset.pattern.permute.xlu0 0
    %293 = vperm.xlu0 %292, %v247
    %v294 = vpop.permute.xlu0 %293
    %297 = vset.pattern.permute.xlu0 0
    %298 = vperm.xlu0 %297, %v248
    %v299 = vpop.permute.xlu0 %298
    %302 = vset.pattern.permute.xlu0 0
    %303 = vperm.xlu0 %302, %v249
    %v304 = vpop.permute.xlu0 %303
    %307 = vset.pattern.permute.xlu0 0
    %308 = vperm.xlu0 %307, %v250
    %v309 = vpop.permute.xlu0 %308
    %vm311 = vcmask 490496
    %v313 = vsel %vm311, %v227, 0
    %v316 = vsel %vm311, %v228, 0
    %v319 = vsel %vm311, %v229, 0
    %v322 = vsel %vm311, %v230, 0
    %v325 = vsel %vm311, %v231, 0
    %v328 = vsel %vm311, %v232, 0
    %v331 = vsel %vm311, %v233, 0
    %v334 = vsel %vm311, %v234, 0
    %v337 = vsel %vm311, %v235, 0
    %v340 = vsel %vm311, %v236, 0
    %v343 = vsel %vm311, %v237, 0
    %v346 = vsel %vm311, %v238, 0
    %vm348 = vcmask 1043456
    %v350 = vsel %vm348, %v226, 0
    %352 = vmatprep.subr.mxu0 0.0
    %353 = vmatpush1.msra.mxu0 0.0
    %354 = vmatprep.subr.mxu0 0.0
    %355 = vmatpush1.msra.mxu0 0.0
    %356 = vmatprep.subr.mxu0 0.0
    %357 = vmatpush1.msra.mxu0 0.0
    %358 = vmatprep.subr.mxu0 0.0
    %359 = vmatpush1.msra.mxu0 0.0
    %360 = vmatprep.subr.mxu0 0.0
    %361 = vmatpush1.msra.mxu0 0.0
    %362 = vmatprep.subr.mxu0 0.0
    %363 = vmatpush1.msra.mxu0 0.0
    %364 = vmatprep.subr.mxu0 0.0
    %365 = vmatpush1.msra.mxu0 0.0
    %366 = vmatprep.subr.mxu0 0.0
    %367 = vmatpush1.msra.mxu0 0.0
    %368 = vmatprep.subr.mxu0 0.0
    %369 = vmatpush1.msra.mxu0 %v350
    %370 = vmatprep.subr.mxu0 0.0
    %371 = vmatpush1.msra.mxu0 %v225
    %372 = vmatprep.subr.mxu0 0.0
    %373 = vmatpush1.msra.mxu0 %v224
    %374 = vmatprep.subr.mxu0 0.0
    %375 = vmatpush1.msra.mxu0 %v223
    %376 = vmatprep.subr.mxu0 0.0
    %377 = vmatpush1.msra.mxu0 %v222
    %378 = vmatprep.subr.mxu0 0.0
    %379 = vmatpush1.msra.mxu0 %v221
    %380 = vmatprep.subr.mxu0 0.0
    %381 = vmatpush1.msra.mxu0 %v220
    %382 = vmatprep.subr.mxu0 0.0
    %383 = vmatpush1.msra.mxu0 %v219
    %384 = vmatprep.subr.mxu0 0.0
    %385 = vmatpush2.msra.mxu0 0.0
    %386 = vmatprep.subr.mxu0 0.0
    %387 = vmatpush2.msra.mxu0 0.0
    %388 = vmatprep.subr.mxu0 0.0
    %389 = vmatpush2.msra.mxu0 0.0
    %390 = vmatprep.subr.mxu0 0.0
    %391 = vmatpush2.msra.mxu0 0.0
    %392 = vmatprep.subr.mxu0 0.0
    %393 = vmatpush2.msra.mxu0 0.0
    %394 = vmatprep.subr.mxu0 0.0
    %395 = vmatpush2.msra.mxu0 0.0
    %396 = vmatprep.subr.mxu0 0.0
    %397 = vmatpush2.msra.mxu0 0.0
    %398 = vmatprep.subr.mxu0 0.0
    %399 = vmatpush2.msra.mxu0 0.0
    %400 = vmatprep.subr.mxu0 0.0
    %401 = vmatpush2.msra.mxu0 0.0
    %402 = vmatprep.subr.mxu0 0.0
    %403 = vmatpush2.msra.mxu0 0.0
    %404 = vmatprep.subr.mxu0 0.0
    %405 = vmatpush2.msra.mxu0 0.0
    %406 = vmatprep.subr.mxu0 0.0
    %407 = vmatpush2.msra.mxu0 0.0
    %408 = vmatprep.subr.mxu0 0.0
    %409 = vmatpush2.msra.mxu0 0.0
    %410 = vmatprep.subr.mxu0 0.0
    %411 = vmatpush2.msra.mxu0 0.0
    %412 = vmatprep.subr.mxu0 0.0
    %413 = vmatpush2.msra.mxu0 0.0
    %414 = vmatprep.subr.mxu0 0.0
    %415 = vmatpush2.msra.mxu0 0.0
    %416 = vmatprep.mubr.f32.mxu0 0.0
    %417 = vmatmul.mubr.f32.gmra.mxu0 %v313
    %v418 = vpop.f32.mrf.mxu0
    %v419 = vadd.f32 %v254, %v418
    %v420 = vpop.f32.mrf.mxu0
    %421 = vmatprep.mubr.f32.mxu0 0.0
    %422 = vmatmul.mubr.f32.gmra.mxu0 %v316
    %v423 = vpop.f32.mrf.mxu0
    %v424 = vadd.f32 %v259, %v423
    %v425 = vpop.f32.mrf.mxu0
    %426 = vmatprep.mubr.f32.mxu0 0.0
    %427 = vmatmul.mubr.f32.gmra.mxu0 %v319
    %v428 = vpop.f32.mrf.mxu0
    %v429 = vadd.f32 %v264, %v428
    %v430 = vpop.f32.mrf.mxu0
    %431 = vmatprep.mubr.f32.mxu0 0.0
    %432 = vmatmul.mubr.f32.gmra.mxu0 %v322
    %v433 = vpop.f32.mrf.mxu0
    %v434 = vadd.f32 %v269, %v433
    %v435 = vpop.f32.mrf.mxu0
    %436 = vmatprep.mubr.f32.mxu0 0.0
    %437 = vmatmul.mubr.f32.gmra.mxu0 %v325
    %v438 = vpop.f32.mrf.mxu0
    %v439 = vadd.f32 %v274, %v438
    %v440 = vpop.f32.mrf.mxu0
    %441 = vmatprep.mubr.f32.mxu0 0.0
    %442 = vmatmul.mubr.f32.gmra.mxu0 %v328
    %v443 = vpop.f32.mrf.mxu0
    %v444 = vadd.f32 %v279, %v443
    %v445 = vpop.f32.mrf.mxu0
    %446 = vmatprep.mubr.f32.mxu0 0.0
    %447 = vmatmul.mubr.f32.gmra.mxu0 %v331
    %v448 = vpop.f32.mrf.mxu0
    %v449 = vadd.f32 %v284, %v448
    %v450 = vpop.f32.mrf.mxu0
    %451 = vmatprep.mubr.f32.mxu0 0.0
    %452 = vmatmul.mubr.f32.gmra.mxu0 %v334
    %v453 = vpop.f32.mrf.mxu0
    %v454 = vadd.f32 %v289, %v453
    %v455 = vpop.f32.mrf.mxu0
    %456 = vmatprep.mubr.f32.mxu0 0.0
    %457 = vmatmul.mubr.f32.gmra.mxu0 %v337
    %v458 = vpop.f32.mrf.mxu0
    %v459 = vadd.f32 %v294, %v458
    %v460 = vpop.f32.mrf.mxu0
    %461 = vmatprep.mubr.f32.mxu0 0.0
    %462 = vmatmul.mubr.f32.gmra.mxu0 %v340
    %v463 = vpop.f32.mrf.mxu0
    %v464 = vadd.f32 %v299, %v463
    %v465 = vpop.f32.mrf.mxu0
    %466 = vmatprep.mubr.f32.mxu0 0.0
    %467 = vmatmul.mubr.f32.gmra.mxu0 %v343
    %v468 = vpop.f32.mrf.mxu0
    %v469 = vadd.f32 %v304, %v468
    %v470 = vpop.f32.mrf.mxu0
    %471 = vmatprep.mubr.f32.mxu0 0.0
    %472 = vmatmul.mubr.f32.gmra.mxu0 %v346
    %v473 = vpop.f32.mrf.mxu0
    %v474 = vadd.f32 %v309, %v473
    %v475 = vpop.f32.mrf.mxu0
    %476 = vdwg.mxu0
    %v477 = vmax.f32 %v419, 0.0
    %v478 = vmax.f32 %v424, 0.0
    %v479 = vmax.f32 %v429, 0.0
    %v480 = vmax.f32 %v434, 0.0
    %v481 = vmax.f32 %v439, 0.0
    %v482 = vmax.f32 %v444, 0.0
    %v483 = vmax.f32 %v449, 0.0
    %v484 = vmax.f32 %v454, 0.0
    %v485 = vmax.f32 %v459, 0.0
    %v486 = vmax.f32 %v464, 0.0
    %v487 = vmax.f32 %v469, 0.0
    %v488 = vmax.f32 %v474, 0.0
    %v489 = vld [vmem:[%s5] sm:$0xf]
    %v490 = vld [vmem:[%s6] sm:$0xf]
    %492 = vset.pattern.permute.xlu0 0
    %493 = vperm.xlu0 %492, %v490
    %v494 = vpop.permute.xlu0 %493
    %vm496 = vcmask 736256
    %v498 = vsel %vm496, %v489, 0
    %v501 = vsel %vm110, %v488, 0
    %503 = vmatprep.subr.mxu0 0.0
    %504 = vmatpush1.msra.mxu0 0.0
    %505 = vmatprep.subr.mxu0 0.0
    %506 = vmatpush1.msra.mxu0 0.0
    %507 = vmatprep.subr.mxu0 0.0
    %508 = vmatpush1.msra.mxu0 0.0
    %509 = vmatprep.subr.mxu0 0.0
    %510 = vmatpush1.msra.mxu0 0.0
    %511 = vmatprep.subr.mxu0 0.0
    %512 = vmatpush1.msra.mxu0 %v501
    %513 = vmatprep.subr.mxu0 0.0
    %514 = vmatpush1.msra.mxu0 %v487
    %515 = vmatprep.subr.mxu0 0.0
    %516 = vmatpush1.msra.mxu0 %v486
    %517 = vmatprep.subr.mxu0 0.0
    %518 = vmatpush1.msra.mxu0 %v485
    %519 = vmatprep.subr.mxu0 0.0
    %520 = vmatpush1.msra.mxu0 %v484
    %521 = vmatprep.subr.mxu0 0.0
    %522 = vmatpush1.msra.mxu0 %v483
    %523 = vmatprep.subr.mxu0 0.0
    %524 = vmatpush1.msra.mxu0 %v482
    %525 = vmatprep.subr.mxu0 0.0
    %526 = vmatpush1.msra.mxu0 %v481
    %527 = vmatprep.subr.mxu0 0.0
    %528 = vmatpush1.msra.mxu0 %v480
    %529 = vmatprep.subr.mxu0 0.0
    %530 = vmatpush1.msra.mxu0 %v479
    %531 = vmatprep.subr.mxu0 0.0
    %532 = vmatpush1.msra.mxu0 %v478
    %533 = vmatprep.subr.mxu0 0.0
    %534 = vmatpush1.msra.mxu0 %v477
    %535 = vmatprep.subr.mxu0 0.0
    %536 = vmatpush2.msra.mxu0 0.0
    %537 = vmatprep.subr.mxu0 0.0
    %538 = vmatpush2.msra.mxu0 0.0
    %539 = vmatprep.subr.mxu0 0.0
    %540 = vmatpush2.msra.mxu0 0.0
    %541 = vmatprep.subr.mxu0 0.0
    %542 = vmatpush2.msra.mxu0 0.0
    %543 = vmatprep.subr.mxu0 0.0
    %544 = vmatpush2.msra.mxu0 0.0
    %545 = vmatprep.subr.mxu0 0.0
    %546 = vmatpush2.msra.mxu0 0.0
    %547 = vmatprep.subr.mxu0 0.0
    %548 = vmatpush2.msra.mxu0 0.0
    %549 = vmatprep.subr.mxu0 0.0
    %550 = vmatpush2.msra.mxu0 0.0
    %551 = vmatprep.subr.mxu0 0.0
    %552 = vmatpush2.msra.mxu0 0.0
    %553 = vmatprep.subr.mxu0 0.0
    %554 = vmatpush2.msra.mxu0 0.0
    %555 = vmatprep.subr.mxu0 0.0
    %556 = vmatpush2.msra.mxu0 0.0
    %557 = vmatprep.subr.mxu0 0.0
    %558 = vmatpush2.msra.mxu0 0.0
    %559 = vmatprep.subr.mxu0 0.0
    %560 = vmatpush2.msra.mxu0 0.0
    %561 = vmatprep.subr.mxu0 0.0
    %562 = vmatpush2.msra.mxu0 0.0
    %563 = vmatprep.subr.mxu0 0.0
    %564 = vmatpush2.msra.mxu0 0.0
    %565 = vmatprep.subr.mxu0 0.0
    %566 = vmatpush2.msra.mxu0 0.0
    %567 = vmatprep.mubr.f32.mxu0 0.0
    %568 = vmatmul.mubr.f32.gmra.mxu0 %v498
    %v569 = vpop.f32.mrf.mxu0
    %v570 = vadd.f32 %v494, %v569
    %v571 = vpop.f32.mrf.mxu0
    %572 = vdwg.mxu0
    %v573 = vmax.f32 %v570, 0.0
    %574 = vst [vmem:[#allocation2] sm:$0xf] %v573
    // Predicated region
    $region30: #{my_model_forward.1} parent=1 // pred_check
      _
    $region31: #{my_model_forward.1} parent=1 // pred_check_branch
      %576 = sbr.rel (0) target = $region33
    $region32: #{my_model_forward.1} parent=1 // pred_region
      %s578 = ssub.s32 64, 64
      %579 = vsyncadd [#allocation3], %s578
      %s581 = sshll.u32 [#allocation2], 4
      %s582 = int_to_ptr.vmem [resolvable:$true] %s581
      %584 = dma.vmem_to_hbm [thread:$0]  %s582, 64, %s7, [#allocation3]
    $region33: #{my_model_forward.1} parent=1 // pred_fallthru
      _
    // Predicated region
    $region34: #{my_model_forward.1} parent=1 // pred_check
      _
    $region35: #{my_model_forward.1} parent=1 // pred_check_branch
      %586 = sbr.rel (0) target = $region37
    $region36: #{my_model_forward.1} parent=1 // pred_region
      %587 = dma.done [#allocation3], 64
    $region37: #{my_model_forward.1} parent=1 // pred_fallthru
      _
    %588 = vsyncpa [#allocation3], 1

</llo_original>
